<compile_context>
chip_gen: v7x
topology: tpu7x:2x2x1
jax: 0.10.0
libtpu: 0.0.40
codegen_flags: <defaults>
</compile_context>

<pallas_src>
import jax
import jax.numpy as jnp
from jax.experimental import pallas as pl
from jax.experimental.pallas import tpu as pltpu

EPS = 1e-6

# Explicit scoped-VMEM limit: above the v5e (16 MiB) / v6e-v7x (32 MiB) scoped
# defaults we rely on, well under v7x's 64 MiB physical VMEM.
_VMEM_LIMIT_BYTES = 32 * 1024 * 1024


def _round_down(x, m):
    return (x // m) * m


def _round_up(x, m):
    return ((x + m - 1) // m) * m


def _pick_rows(batch, bytes_per_row, tile_bytes):
    """Row (sublane) tile: the full batch, or a multiple of 8 sized to ~tile_bytes."""
    rows = max(1, tile_bytes // max(1, bytes_per_row))
    if rows >= batch or batch <= 8:
        return batch
    return max(8, _round_down(rows, 8))


def _pick_lanes(n, cap):
    """Lane tile: the full axis if narrow, else a multiple of 128 capped at `cap`."""
    if n < 128:
        return n
    return max(128, min(_round_down(cap, 128), _round_down(n, 128)))


def _ensure_two_parallel_blocks(tb, tn, batch, n):
    """v7x has 2 TensorCores; a single-step 'parallel' grid leaves one idle."""
    if pl.cdiv(batch, tb) * pl.cdiv(n, tn) >= 2:
        return tb, tn
    if tn >= 256:                       # only reachable when tn == n and n % 128 == 0
        return tb, max(128, _round_down(tn // 2, 128))
    if batch >= 16:
        return max(8, _round_up(batch // 2, 8)), tn
    return tb, tn                       # tiny (demo-sized) problem: nothing to split


def _make_norm_sum_kernel(batch, num_chan, k_blades, tb, tc):
    """Pass 1: sums_ref[0, c] = sum_b sqrt(|sum_k metric[k] * x[b, c, k]^2|)."""
    tn = tc * k_blades
    mask_rows = (batch % tb) != 0
    mask_cols = (num_chan % tc) != 0
    n_total = num_chan * k_blades

    def kernel(x_ref, g_ref, sums_ref):
        b = pl.program_id(1)            # batch tile index (reduction axis, innermost)

        @pl.when(b == 0)
        def _init():
            sums_ref[...] = jnp.zeros_like(sums_ref)

        x = x_ref[...].astype(jnp.float32)          # (tb, tc*K), lane-dense
        y = x * x                                   # blade metric is folded into g_ref

        # Ragged tails read unspecified data; zero it so it cannot leak into the
        # matmul below (e.g. Inf * 0 -> NaN through the zero entries of G).
        if mask_rows:
            row = jax.lax.broadcasted_iota(jnp.int32, (tb, 1), 0) + b * tb
            y = jnp.where(row < batch, y, 0.0)
        if mask_cols:
            col = (jax.lax.broadcasted_iota(jnp.int32, (1, tn), 1)
                   + pl.program_id(0) * tn)
            y = jnp.where(col < n_total, y, 0.0)

        # Per-channel blade reduction on the (otherwise idle) MXU:
        #   q[b, c] = sum_k metric[k] * x[b, c, k]^2 = y @ G,
        #   G[j, c] = metric[j % K] if j // K == c else 0   (block diagonal).
        q = jnp.dot(y, g_ref[...], preferred_element_type=jnp.float32)   # (tb, tc)
        norm = jnp.sqrt(jnp.abs(q))
        sums_ref[...] += jnp.sum(norm, axis=0, keepdims=True)

    return kernel


def _scale_kernel(x_ref, scale_ref, o_ref):
    """Pass 2: out = x * (a / denom); multiply kept in f32 (exact vs. reference)."""
    o_ref[...] = (x_ref[...].astype(jnp.float32) * scale_ref[...]).astype(o_ref.dtype)


def mv_batchnorm(x, metric, a, *, tile_bytes=4 * 1024 * 1024):
    """MVBatchNorm forward.  x: (B, C, K), metric: (K,), a: (1, C) -> (B, C, K).

    tile_bytes targets the size of one x tile; 4 MiB is safe on every generation with
    the explicit 32 MiB scoped-VMEM limit.  On v6e/v7x it can be raised to ~8 MiB for
    long grids to amortize the ~0.35 us per-grid-step overhead further.
    """
    B, C, K = x.shape
    N = C * K
    assert metric.shape == (K,)
    itemsize = jnp.dtype(x.dtype).itemsize

    # Lane-dense flat view (free row-major reshape): channels*blades on the 128-lane
    # axis.  This removes the two full-tensor HBM transposes of the previous version.
    x_flat = x.reshape(B, N)

    # -------------------- pass 1: per-channel batch-summed norms --------------------
    if C < 128:
        # TODO(synk): if the surrounding model can guarantee C % 128 == 0, these
        # full-extent (masked-store) fallbacks become dead code.
        tc1 = C
    else:
        tc1 = 128 if C < 512 else 256      # >=2 channel blocks keeps both v7x TCs busy
    tn1 = tc1 * K
    tb1 = _pick_rows(B, tn1 * itemsize, tile_bytes)

    # Block-diagonal metric matrix for the MXU blade reduction (tiny, fetched once).
    lane = jnp.arange(tn1, dtype=jnp.int32)
    chan = jnp.arange(tc1, dtype=jnp.int32)
    g = (lane[:, None] // K == chan[None, :]).astype(jnp.float32)
    g = g * jnp.tile(metric.astype(jnp.float32), tc1)[:, None]

    norm_sum = pl.pallas_call(
        _make_norm_sum_kernel(B, C, K, tb1, tc1),
        out_shape=jax.ShapeDtypeStruct((1, C), jnp.float32),
        grid_spec=pltpu.PrefetchScalarGridSpec(
            num_scalar_prefetch=0,
            grid=(pl.cdiv(C, tc1), pl.cdiv(B, tb1)),        # batch (reduction) last
            in_specs=[
                pl.BlockSpec((tb1, tn1), lambda j, b: (b, j)),
                pl.BlockSpec((tn1, tc1), lambda j, b: (0, 0)),   # constant -> resident
            ],
            out_specs=pl.BlockSpec((1, tc1), lambda j, b: (0, j)),
        ),
        compiler_params=pltpu.CompilerParams(
            dimension_semantics=("parallel", "arbitrary"),
            vmem_limit_bytes=_VMEM_LIMIT_BYTES),
    )(x_flat, g)

    # Tiny per-channel epilogue in the wrapper (C and C*K elements - negligible).
    denom = norm_sum / B + EPS                                  # (1, C) f32
    scale_c = a.astype(jnp.float32).reshape(1, C) / denom       # a / denom, exact f32
    scale_flat = jnp.repeat(scale_c, K, axis=1)                 # (1, C*K)

    # ----------------------- pass 2: elementwise per-channel scale ------------------
    tn2 = _pick_lanes(N, 2048)
    tb2 = _pick_rows(B, tn2 * itemsize, tile_bytes)
    tb2, tn2 = _ensure_two_parallel_blocks(tb2, tn2, B, N)

    out_flat = pl.pallas_call(
        _scale_kernel,
        out_shape=jax.ShapeDtypeStruct((B, N), x.dtype),
        grid_spec=pltpu.PrefetchScalarGridSpec(
            num_scalar_prefetch=0,
            grid=(pl.cdiv(B, tb2), pl.cdiv(N, tn2)),
            in_specs=[
                pl.BlockSpec((tb2, tn2), lambda i, j: (i, j)),
                pl.BlockSpec((1, tn2), lambda i, j: (0, j)),
            ],
            out_specs=pl.BlockSpec((tb2, tn2), lambda i, j: (i, j)),
        ),
        compiler_params=pltpu.CompilerParams(
            dimension_semantics=("parallel", "parallel"),
            vmem_limit_bytes=_VMEM_LIMIT_BYTES),
    )(x_flat, scale_flat)

    return out_flat.reshape(B, C, K)


def mv_batchnorm_ref(x, metric, a):
    q = jnp.sum(x * x * metric[None, None, :], axis=-1, keepdims=True)
    norm = jnp.sqrt(jnp.abs(q))
    denom = jnp.mean(norm, axis=0, keepdims=True) + EPS
    return a.reshape(1, -1, 1) * x / denom


if __name__ == "__main__":
    # 3-D Clifford algebra -> K = 2**3 = 8 blades, batch = 2, channels = 4.
    B, C, K = 2, 4, 8

    key = jax.random.PRNGKey(0)
    x = jax.random.normal(key, (B, C, K), dtype=jnp.float32)

    # Deterministic parameters (from __init__): a = ones(1, channels).
    a = jnp.ones((1, C), dtype=jnp.float32)
    # Diagonal blade metric of Cl(3,0): grades [0,1,1,1,2,2,2,3] -> sign (-1)^{g(g-1)/2}
    metric = jnp.array([1., 1., 1., 1., -1., -1., -1., -1.], dtype=jnp.float32)

    out = jax.block_until_ready(mv_batchnorm(x, metric, a))
    ref = mv_batchnorm_ref(x, metric, a)

    assert out.shape == (B, C, K)
    assert jnp.allclose(out, ref, atol=1e-5, rtol=1e-5), float(jnp.max(jnp.abs(out - ref)))

    print("KERNEL_OK")
</pallas_src>

<mosaic_0001>
module attributes {stable_mosaic.version = 11 : i64} {
  func.func @kernel(%arg0: i32, %arg1: i32, %arg2: memref<2x32xf32, #tpu.memory_space<vmem>>, %arg3: memref<32x4xf32, #tpu.memory_space<vmem>>, %arg4: memref<1x4xf32, #tpu.memory_space<vmem>>) attributes {dimension_semantics = [#tpu.dimension_semantics<parallel>, #tpu.dimension_semantics<arbitrary>], iteration_bounds = array<i64: 1, 1>, scalar_prefetch = 0 : i64, scratch_operands = 0 : i64, tpu.core_type = #tpu.core_type<tc>, window_params = [{transform_indices = @transform_0, window_bounds = array<i64: 2, 32>}, {pipeline_mode = #tpu.pipeline_mode<synchronous>, transform_indices = @transform_1, window_bounds = array<i64: 32, 4>}, {transform_indices = @transform_2, window_bounds = array<i64: 1, 4>}]} {
    %c0_i32 = arith.constant 0 : i32
    %0 = arith.cmpi eq, %arg1, %c0_i32 : i32
    %1 = arith.extui %0 : i1 to i32
    %c0_i32_0 = arith.constant 0 : i32
    %2 = arith.cmpi ne, %1, %c0_i32_0 : i32
    scf.if %2 {
      %cst_9 = arith.constant 0.000000e+00 : f32
      %14 = vector.broadcast %cst_9 : f32 to vector<1x4xf32>
      %c0_10 = arith.constant 0 : index
      %c0_11 = arith.constant 0 : index
      %15 = vector.load %arg4[%c0_10, %c0_11] : memref<1x4xf32, #tpu.memory_space<vmem>>, vector<1x4xf32>
      tpu.vector_store %arg4[%c0_10, %c0_11], %14 {strides = array<i32>} : memref<1x4xf32, #tpu.memory_space<vmem>>, vector<1x4xf32>,
    } else {
    }
    %c0 = arith.constant 0 : index
    %c0_1 = arith.constant 0 : index
    %3 = vector.load %arg2[%c0, %c0_1] : memref<2x32xf32, #tpu.memory_space<vmem>>, vector<2x32xf32>
    %4 = arith.mulf %3, %3 : vector<2x32xf32>
    %c0_2 = arith.constant 0 : index
    %c0_3 = arith.constant 0 : index
    %5 = vector.load %arg3[%c0_2, %c0_3] : memref<32x4xf32, #tpu.memory_space<vmem>>, vector<32x4xf32>
    %cst = arith.constant dense<0.000000e+00> : vector<2x4xf32>
    %6 = tpu.matmul %4, %5, %cst {dimension_numbers = #tpu.dot_dimension_numbers<[1], [0], [0], [1], [0, 0, 1, 1], [], []>} : vector<2x32xf32>, vector<32x4xf32>, vector<2x4xf32> -> vector<2x4xf32>
    %7 = math.absf %6 : vector<2x4xf32>
    %8 = math.sqrt %7 : vector<2x4xf32>
    %c0_4 = arith.constant 0 : index
    %c0_5 = arith.constant 0 : index
    %9 = vector.load %arg4[%c0_4, %c0_5] : memref<1x4xf32, #tpu.memory_space<vmem>>, vector<1x4xf32>
    %cst_6 = arith.constant dense<0.000000e+00> : vector<4xf32>
    %10 = vector.multi_reduction <add>, %8, %cst_6 [0] : vector<2x4xf32> to vector<4xf32>
    %11 = vector.shape_cast %10 : vector<4xf32> to vector<1x4xf32>
    %12 = arith.addf %9, %11 : vector<1x4xf32>
    %c0_7 = arith.constant 0 : index
    %c0_8 = arith.constant 0 : index
    %13 = vector.load %arg4[%c0_7, %c0_8] : memref<1x4xf32, #tpu.memory_space<vmem>>, vector<1x4xf32>
    tpu.vector_store %arg4[%c0_7, %c0_8], %12 {strides = array<i32>} : memref<1x4xf32, #tpu.memory_space<vmem>>, vector<1x4xf32>,
    return
  }
  func.func @transform_0(%arg0: i32, %arg1: i32) -> (i32, i32) {
    %c0_i32 = arith.constant 0 : i32
    return %arg1, %arg0 : i32, i32
  }
  func.func @transform_1(%arg0: i32, %arg1: i32) -> (i32, i32) {
    %c0_i32 = arith.constant 0 : i32
    %c0_i32_0 = arith.constant 0 : i32
    %c0_i32_1 = arith.constant 0 : i32
    return %c0_i32, %c0_i32_0 : i32, i32
  }
  func.func @transform_2(%arg0: i32, %arg1: i32) -> (i32, i32) {
    %c0_i32 = arith.constant 0 : i32
    %c0_i32_0 = arith.constant 0 : i32
    return %c0_i32, %arg0 : i32, i32
  }
}

</mosaic_0001>

<llo_original>
// kernel: tpu_custom_call.1
$region0: #{tpu_custom_call.1}
  #allocation0 [shape = 'u32[]', space=smem, size = 0x4, offset = 0x4, fixed_abs, tag = 'smem constant byte address 0x4 - core index']
  #allocation1 [shape = 'u32[144,128]{1,0:T(1,128)}', space=vmem, size = 0x12000, scoped, tag = 'internal scratch']
  %s0 = inlined_call_operand.vmem [shape: f32[2,32], index: 0, kind: input, shape index: {}]
  %s1 = inlined_call_operand.vmem [shape: f32[32,4], index: 1, kind: input, shape index: {}]
  %s2 = inlined_call_operand.hbm [shape: f32[1,4], index: 2, kind: output, shape index: {}]
  %s3 = sld [smem:[#allocation0]]
  $region22: #{tpu_custom_call.1} parent=0
    _
  %s5 = ssub.s32 1, %s3
  %s6 = scalar_select 0, %s5, %s3
  $region1: #{tpu_custom_call.1} parent=0
    #allocation2 [shape = 'u8[512]{0}', space=vmem, size = 0x400, scoped, tag = 'output window, operand 0, single buffered']
    #allocation3 [shape = 's32[1]{0}', space=sflag, size = 0x4, scoped, tag = 'scoped memory for tpu_custom_call.1']
    %7 = vsyncpa [#allocation3], 0
    // Predicated region
    $region2: #{tpu_custom_call.1} parent=1 // pred_check
      _
    $region3: #{tpu_custom_call.1} parent=1 // pred_check_branch
      %9 = sbr.rel (0) target = $region5
    $region4: #{tpu_custom_call.1} parent=1 // pred_region
      _
    $region5: #{tpu_custom_call.1} parent=1 // pred_fallthru
      _
    // Predicated region
    $region6: #{tpu_custom_call.1} parent=1 // pred_check
      _
    $region7: #{tpu_custom_call.1} parent=1 // pred_check_branch
      %11 = sbr.rel (0) target = $region9
    $region8: #{tpu_custom_call.1} parent=1 // pred_region
      _
    $region9: #{tpu_custom_call.1} parent=1 // pred_fallthru
      _
    %p12 = scmp.eq.s32.totalorder 0, 0
    // Predicated region
    $region10: #{tpu_custom_call.1} parent=1 // pred_check
      %p13 = pneg %p12
    $region11: #{tpu_custom_call.1} parent=1 // pred_check_branch
      %15 = sbr.rel (%p13) target = $region13
    $region12: #{tpu_custom_call.1} parent=1 // pred_region
      %vm16 = vcmask 24576
      %17 = vst.msk [vmem:[#allocation2] sm:$0x1] %vm16, 0.0
    $region13: #{tpu_custom_call.1} parent=1 // pred_fallthru
      _
    %v18 = vld [vmem:[%s0] sm:$0x3]
    %v19 = vmul.f32 %v18, %v18
    %v20 = vld [vmem:[%s1] sm:$0xff]
    %v21 = vld [vmem:[%s1 + $0x8] sm:$0xff]
    %v22 = vld [vmem:[%s1 + $0x10] sm:$0xff]
    %v23 = vld [vmem:[%s1 + $0x18] sm:$0xff]
    %vm24 = vcmask 261120
    %v26 = vsel %vm24, %v19, 0
    %28 = vmatprep.subr.mxu0 0.0
    %29 = vmatpush1.msra.mxu0 %v20
    %30 = vmatprep.subr.mxu0 0.0
    %31 = vmatpush1.msra.mxu0 %v21
    %32 = vmatprep.subr.mxu0 0.0
    %33 = vmatpush1.msra.mxu0 %v22
    %34 = vmatprep.subr.mxu0 0.0
    %35 = vmatpush1.msra.mxu0 %v23
    %36 = vmatprep.subr.mxu0 0.0
    %37 = vmatpush1.msra.mxu0 0.0
    %38 = vmatprep.subr.mxu0 0.0
    %39 = vmatpush1.msra.mxu0 0.0
    %40 = vmatprep.subr.mxu0 0.0
    %41 = vmatpush1.msra.mxu0 0.0
    %42 = vmatprep.subr.mxu0 0.0
    %43 = vmatpush1.msra.mxu0 0.0
    %44 = vmatprep.subr.mxu0 0.0
    %45 = vmatpush1.msra.mxu0 0.0
    %46 = vmatprep.subr.mxu0 0.0
    %47 = vmatpush1.msra.mxu0 0.0
    %48 = vmatprep.subr.mxu0 0.0
    %49 = vmatpush1.msra.mxu0 0.0
    %50 = vmatprep.subr.mxu0 0.0
    %51 = vmatpush1.msra.mxu0 0.0
    %52 = vmatprep.subr.mxu0 0.0
    %53 = vmatpush1.msra.mxu0 0.0
    %54 = vmatprep.subr.mxu0 0.0
    %55 = vmatpush1.msra.mxu0 0.0
    %56 = vmatprep.subr.mxu0 0.0
    %57 = vmatpush1.msra.mxu0 0.0
    %58 = vmatprep.subr.mxu0 0.0
    %59 = vmatpush1.msra.mxu0 0.0
    %60 = vmatprep.subr.mxu0 0.0
    %61 = vmatpush1.msra.mxu0 0.0
    %62 = vmatprep.subr.mxu0 0.0
    %63 = vmatpush1.msra.mxu0 0.0
    %64 = vmatprep.subr.mxu0 0.0
    %65 = vmatpush1.msra.mxu0 0.0
    %66 = vmatprep.subr.mxu0 0.0
    %67 = vmatpush1.msra.mxu0 0.0
    %68 = vmatprep.subr.mxu0 0.0
    %69 = vmatpush1.msra.mxu0 0.0
    %70 = vmatprep.subr.mxu0 0.0
    %71 = vmatpush1.msra.mxu0 0.0
    %72 = vmatprep.subr.mxu0 0.0
    %73 = vmatpush1.msra.mxu0 0.0
    %74 = vmatprep.subr.mxu0 0.0
    %75 = vmatpush1.msra.mxu0 0.0
    %76 = vmatprep.subr.mxu0 0.0
    %77 = vmatpush1.msra.mxu0 0.0
    %78 = vmatprep.subr.mxu0 0.0
    %79 = vmatpush1.msra.mxu0 0.0
    %80 = vmatprep.subr.mxu0 0.0
    %81 = vmatpush1.msra.mxu0 0.0
    %82 = vmatprep.subr.mxu0 0.0
    %83 = vmatpush1.msra.mxu0 0.0
    %84 = vmatprep.subr.mxu0 0.0
    %85 = vmatpush1.msra.mxu0 0.0
    %86 = vmatprep.subr.mxu0 0.0
    %87 = vmatpush1.msra.mxu0 0.0
    %88 = vmatprep.subr.mxu0 0.0
    %89 = vmatpush1.msra.mxu0 0.0
    %90 = vmatprep.subr.mxu0 0.0
    %91 = vmatpush1.msra.mxu0 0.0
    %92 = vmatprep.mubr.f32.mxu0 0.0
    %93 = vmatmul.mubr.f32.gmra.mrb[0].mxu0 %v26
    %v94 = vpop.f32.mrb[0].mxu0
    %v95 = vadd.f32 0.0, %v94
    %v96 = vpop.f32.mrb[0].mxu0
    %97 = vdwg.mxu0
    %v98 = vand.u32 2147483647, %v95
    %v99 = vrsqrt.pop %v98
    %v100 = vmul.f32 %v98, %v99
    %vm101 = vcmp.eq.f32.partialorder %v98, inf
    %v102 = vsel %vm101, %v98, %v100
    %vm103 = vcmp.eq.f32.partialorder %v98, 0.0
    %v104 = vand.u32 %v98, 2147483648
    %v105 = vsel %vm103, %v104, %v102
    %v106 = vld [vmem:[#allocation2] sm:$0x1]
    %vm107 = vcmask 25600
    %v108 = vsel %vm107, %v105, 0.0
    %v109 = vrot.slane %v108, 4
    %v110 = vadd.f32 %v108, %v109
    %v111 = vrot.slane %v110, 2
    %v112 = vadd.f32 %v110, %v111
    %v113 = vrot.slane %v112, 1
    %v114 = vadd.f32 %v112, %v113
    %v115 = vadd.f32 %v106, %v114
    %vm116 = vcmask 24576
    %117 = vst.msk [vmem:[#allocation2] sm:$0x1] %vm116, %v115
    // Predicated region
    $region14: #{tpu_custom_call.1} parent=1 // pred_check
      _
    $region15: #{tpu_custom_call.1} parent=1 // pred_check_branch
      %119 = sbr.rel (0) target = $region17
    $region16: #{tpu_custom_call.1} parent=1 // pred_region
      %s121 = ssub.s32 16, 16
      %122 = vsyncadd [#allocation3], %s121
      %s124 = sshll.u32 [#allocation2], 4
      %s125 = int_to_ptr.vmem [resolvable:$true] %s124
      %127 = dma.vmem_to_hbm [thread:$0]  %s125, 16, %s2, [#allocation3]
    $region17: #{tpu_custom_call.1} parent=1 // pred_fallthru
      _
    // Predicated region
    $region18: #{tpu_custom_call.1} parent=1 // pred_check
      _
    $region19: #{tpu_custom_call.1} parent=1 // pred_check_branch
      %129 = sbr.rel (0) target = $region21
    $region20: #{tpu_custom_call.1} parent=1 // pred_region
      %130 = dma.done [#allocation3], 16
    $region21: #{tpu_custom_call.1} parent=1 // pred_fallthru
      _
    %131 = vsyncpa [#allocation3], 1

</llo_original>
